<compile_context>
chip_gen: v6e
topology: v6e:2x2x1
jax: 0.10.0
libtpu: 0.0.40
codegen_flags: <defaults>
</compile_context>

<pallas_src>
import jax
import jax.numpy as jnp
from jax.experimental import pallas as pl
from jax.experimental.pallas import tpu as pltpu


def _ds_conv_kernel(a_ref, b_ref, wp_ref, w2_ref, bias_ref, out_ref):
    # a_ref   : (1, T, 2, Wo+1, 2C)  row pairs [T*t, T*(t+1)); a[0,p,s,w,:]
    #           holds channels of input (row 2*(T*t+p)+s, cols 2w and 2w+1).
    # b_ref   : (1, 1, 2, Wo+1, 2C)  next row pair (halo for the ki=2 tap).
    # wp_ref  : (3, 2C, C)  conv weights [kj=0 ; kj=1] stacked along C_in, per ki.
    # w2_ref  : (3, C, C)   kj=2 conv weights, per ki.
    # bias_ref: (1, C)      f32 bias.
    # out_ref : (1, C, T*Wo)  NCHW output rows [T*t, T*(t+1)), lane-dense store.
    t_oh = a_ref.shape[1]
    wo1 = a_ref.shape[3]
    wo = wo1 - 1
    c = w2_ref.shape[-1]
    m = t_oh * wo

    a = a_ref[0]                     # (T, 2, Wo+1, 2C)
    r0 = a[:, 0]                     # input rows 2*oh       (ki = 0)
    r1 = a[:, 1]                     # input rows 2*oh + 1   (ki = 1)
    nxt = b_ref[0][:, 0]             # (1, Wo+1, 2C): input row 2*(oh_last + 1)
    if t_oh > 1:
        r2 = jnp.concatenate([a[1:, 0], nxt], axis=0)   # rows 2*oh + 2 (ki = 2)
    else:
        r2 = nxt

    # bias folded into the accumulator init (one fewer VPU add pass)
    acc = jnp.broadcast_to(bias_ref[...].astype(jnp.float32), (m, c))
    for ki, r in enumerate((r0, r1, r2)):
        # cols 2*ow and 2*ow+1 live in pair ow -> one K=2C dot covers kj=0,1
        lhs01 = r[:, :wo, :].reshape(m, 2 * c)
        # col 2*ow+2 is the first half of pair ow+1 -> K=C dot for kj=2
        lhs2 = r[:, 1:, :c].reshape(m, c)
        acc = acc + jnp.dot(lhs01, wp_ref[ki], preferred_element_type=jnp.float32)
        acc = acc + jnp.dot(lhs2, w2_ref[ki], preferred_element_type=jnp.float32)

    out_ref[0] = acc.T.astype(out_ref.dtype)        # (C, M): dense-lane NCHW store


def _pick_tile_oh(ho, wo, c, itemsize, budget=4 << 20):
    """Output rows per grid step.

    Prefer the largest divisor of Ho whose input band fits `budget` bytes per
    buffer (double-buffered by Pallas) AND whose output lane extent tile*Wo is
    a multiple of 128 (unmasked stores).  Full extent is always legal.
    """
    def band_bytes(t):
        return t * 2 * (wo + 1) * 2 * c * itemsize

    for t in range(ho, 0, -1):
        if ho % t or band_bytes(t) > budget:
            continue
        if t == ho or (t * wo) % 128 == 0:
            return t
    for t in range(ho, 0, -1):                      # nothing lane-aligned fits
        if ho % t == 0 and band_bytes(t) <= budget:
            return t
    return ho                                       # fallback (always legal)


def downsample_block(x_nchw, weight, bias, *, compute_dtype=jnp.float32):
    """DownSampleBlock forward.

    x_nchw : (B, C, H, W)   weight : (C, C, 3, 3) OIHW   bias : (C,)
    returns (B, C, Ho, Wo) in x_nchw.dtype.
    compute_dtype: MXU operand dtype (jnp.bfloat16 recommended on v6e/v7x);
    accumulation is always f32.
    """
    B, C, H, W = x_nchw.shape
    out_dtype = x_nchw.dtype
    Ho = (H - 2) // 2 + 1            # = ((H+1) - 3)//2 + 1
    Wo = (W - 2) // 2 + 1
    Hp = 2 * Ho + 2                  # padded extents (>= H+1); extra rows/cols
    Wp = 2 * Wo + 2                  # are zeros and never read by any tap.

    # Input: cast + pad + NCHW->NHWC (one fused XLA pass), then a FREE
    # row-major reshape into (row-pair, col-pair) form.  No im2col in HBM.
    x = x_nchw.astype(compute_dtype)
    x = jnp.pad(x, ((0, 0), (0, 0), (0, Hp - H), (0, Wp - W)))
    x = jnp.transpose(x, (0, 2, 3, 1))                    # (B, Hp, Wp, C)
    x5 = x.reshape(B, Ho + 1, 2, Wo + 1, 2 * C)           # free view

    # Weights: OIHW -> (ki, kj, Cin, Cout); stack kj=0,1 along Cin.
    w_t = jnp.transpose(weight, (2, 3, 1, 0)).astype(compute_dtype)  # (3,3,C,C)
    wp = jnp.concatenate([w_t[:, 0], w_t[:, 1]], axis=1)             # (3, 2C, C)
    w2 = w_t[:, 2]                                                   # (3, C, C)
    b2 = bias.reshape(1, C).astype(jnp.float32)

    tile = _pick_tile_oh(Ho, Wo, C, jnp.dtype(compute_dtype).itemsize)
    grid = (B, Ho // tile)

    flops = 2 * B * Ho * Wo * 9 * C * C
    bytes_accessed = (x5.size * x5.dtype.itemsize
                      + wp.size * wp.dtype.itemsize
                      + w2.size * w2.dtype.itemsize
                      + B * C * Ho * Wo * jnp.dtype(out_dtype).itemsize)

    out_flat = pl.pallas_call(
        _ds_conv_kernel,
        out_shape=jax.ShapeDtypeStruct((B, C, Ho * Wo), out_dtype),
        grid=grid,
        in_specs=[
            # band of `tile` row pairs for this step (contiguous DMA)
            pl.BlockSpec((1, tile, 2, Wo + 1, 2 * C),
                         lambda b, t: (b, t, 0, 0, 0)),
            # halo: the next row pair (only its first sub-row is used)
            pl.BlockSpec((1, 1, 2, Wo + 1, 2 * C),
                         lambda b, t: (b, (t + 1) * tile, 0, 0, 0)),
            # weights / bias: full blocks, constant index -> stay resident
            pl.BlockSpec((3, 2 * C, C), lambda b, t: (0, 0, 0)),
            pl.BlockSpec((3, C, C), lambda b, t: (0, 0, 0)),
            pl.BlockSpec((1, C), lambda b, t: (0, 0)),
        ],
        out_specs=pl.BlockSpec((1, C, tile * Wo), lambda b, t: (b, 0, t)),
        compiler_params=pltpu.CompilerParams(
            dimension_semantics=("parallel", "parallel"),
            vmem_limit_bytes=32 * 1024 * 1024),
        cost_estimate=pl.CostEstimate(
            flops=flops, transcendentals=0, bytes_accessed=bytes_accessed),
    )(x5, x5, wp, w2, b2)

    return out_flat.reshape(B, C, Ho, Wo)                 # free reshape, NCHW


def _reference(x_nchw, weight, bias):
    """Pure-JAX reference (lax conv) for correctness checking."""
    y = jax.lax.conv_general_dilated(
        x_nchw, weight,
        window_strides=(2, 2),
        padding=((0, 1), (0, 1)),
        dimension_numbers=("NCHW", "OIHW", "NCHW"),
    )
    return y + bias.reshape(1, -1, 1, 1)


if __name__ == "__main__":
    key = jax.random.PRNGKey(0)
    kx, kw, kb = jax.random.split(key, 3)

    B, C, H, W = 2, 4, 16, 16
    x = jax.random.normal(kx, (B, C, H, W), dtype=jnp.float32)

    # Deterministic parameter init (matches nn.Conv2d uniform bound)
    fan_in = C * 3 * 3
    bound = 1.0 / (fan_in ** 0.5)
    weight = jax.random.uniform(kw, (C, C, 3, 3), jnp.float32, -bound, bound)
    bias = jax.random.uniform(kb, (C,), jnp.float32, -bound, bound)

    # f32 operand path (exact module semantics)
    out = jax.block_until_ready(downsample_block(x, weight, bias))
    ref = _reference(x, weight, bias)
    assert out.shape == (B, C, 8, 8), out.shape
    err = float(jnp.max(jnp.abs(out - ref)))
    assert jnp.allclose(out, ref, atol=1e-3, rtol=1e-3), f"f32 mismatch: {err}"

    # bf16 operand path, f32 accumulation (recommended MXU path on v6e/v7x)
    out_bf = jax.block_until_ready(
        downsample_block(x, weight, bias, compute_dtype=jnp.bfloat16))
    ref_bf = _reference(x.astype(jnp.bfloat16).astype(jnp.float32),
                        weight.astype(jnp.bfloat16).astype(jnp.float32), bias)
    err_bf = float(jnp.max(jnp.abs(out_bf - ref_bf)))
    assert jnp.allclose(out_bf, ref_bf, atol=1e-2, rtol=1e-2), \
        f"bf16 mismatch: {err_bf}"

    print("KERNEL_OK")
</pallas_src>

<mosaic_0001>
module attributes {stable_mosaic.version = 11 : i64} {
  func.func @_ds_conv_kernel(%arg0: i32, %arg1: i32, %arg2: memref<1x8x2x9x8xf32, #tpu.memory_space<vmem>>, %arg3: memref<1x1x2x9x8xf32, #tpu.memory_space<vmem>>, %arg4: memref<3x8x4xf32, #tpu.memory_space<vmem>>, %arg5: memref<3x4x4xf32, #tpu.memory_space<vmem>>, %arg6: memref<1x4xf32, #tpu.memory_space<vmem>>, %arg7: memref<1x4x64xf32, #tpu.memory_space<vmem>>) attributes {dimension_semantics = [#tpu.dimension_semantics<parallel>, #tpu.dimension_semantics<parallel>], iteration_bounds = array<i64: 2, 1>, scalar_prefetch = 0 : i64, scratch_operands = 0 : i64, tpu.core_type = #tpu.core_type<tc>, window_params = [{transform_indices = @transform_0, window_bounds = array<i64: 1, 8, 2, 9, 8>}, {transform_indices = @transform_1, window_bounds = array<i64: 1, 1, 2, 9, 8>}, {pipeline_mode = #tpu.pipeline_mode<synchronous>, transform_indices = @transform_2, window_bounds = array<i64: 3, 8, 4>}, {pipeline_mode = #tpu.pipeline_mode<synchronous>, transform_indices = @transform_3, window_bounds = array<i64: 3, 4, 4>}, {pipeline_mode = #tpu.pipeline_mode<synchronous>, transform_indices = @transform_4, window_bounds = array<i64: 1, 4>}, {transform_indices = @transform_5, window_bounds = array<i64: 1, 4, 64>}]} {
    %c0 = arith.constant 0 : index
    %c0_0 = arith.constant 0 : index
    %c0_1 = arith.constant 0 : index
    %c0_2 = arith.constant 0 : index
    %c0_3 = arith.constant 0 : index
    %0 = vector.load %arg2[%c0, %c0_0, %c0_1, %c0_2, %c0_3] : memref<1x8x2x9x8xf32, #tpu.memory_space<vmem>>, vector<1x8x2x9x8xf32>
    %1 = vector.shape_cast %0 : vector<1x8x2x9x8xf32> to vector<8x2x9x8xf32>
    %2 = vector.extract_strided_slice %1 {offsets = [0, 0, 0, 0], sizes = [8, 1, 9, 8], strides = [1, 1, 1, 1]} : vector<8x2x9x8xf32> to vector<8x1x9x8xf32>
    %3 = vector.shape_cast %2 : vector<8x1x9x8xf32> to vector<8x9x8xf32>
    %4 = vector.extract_strided_slice %1 {offsets = [0, 1, 0, 0], sizes = [8, 1, 9, 8], strides = [1, 1, 1, 1]} : vector<8x2x9x8xf32> to vector<8x1x9x8xf32>
    %5 = vector.shape_cast %4 : vector<8x1x9x8xf32> to vector<8x9x8xf32>
    %c0_4 = arith.constant 0 : index
    %c0_5 = arith.constant 0 : index
    %c0_6 = arith.constant 0 : index
    %c0_7 = arith.constant 0 : index
    %c0_8 = arith.constant 0 : index
    %6 = vector.load %arg3[%c0_4, %c0_5, %c0_6, %c0_7, %c0_8] : memref<1x1x2x9x8xf32, #tpu.memory_space<vmem>>, vector<1x1x2x9x8xf32>
    %7 = vector.shape_cast %6 : vector<1x1x2x9x8xf32> to vector<1x2x9x8xf32>
    %8 = vector.extract_strided_slice %7 {offsets = [0, 0, 0, 0], sizes = [1, 1, 9, 8], strides = [1, 1, 1, 1]} : vector<1x2x9x8xf32> to vector<1x1x9x8xf32>
    %9 = vector.shape_cast %8 : vector<1x1x9x8xf32> to vector<1x9x8xf32>
    %10 = vector.extract_strided_slice %1 {offsets = [1, 0, 0, 0], sizes = [7, 1, 9, 8], strides = [1, 1, 1, 1]} : vector<8x2x9x8xf32> to vector<7x1x9x8xf32>
    %11 = vector.shape_cast %10 : vector<7x1x9x8xf32> to vector<7x9x8xf32>
    %12 = tpu.concatenate %11, %9 in 0 : vector<7x9x8xf32>, vector<1x9x8xf32> -> vector<8x9x8xf32>
    %c0_9 = arith.constant 0 : index
    %c0_10 = arith.constant 0 : index
    %13 = vector.load %arg6[%c0_9, %c0_10] : memref<1x4xf32, #tpu.memory_space<vmem>>, vector<1x4xf32>
    %14 = vector.shape_cast %13 : vector<1x4xf32> to vector<1x4xf32>
    %15 = vector.broadcast %14 : vector<1x4xf32> to vector<64x4xf32>
    %16 = vector.extract_strided_slice %3 {offsets = [0, 0, 0], sizes = [8, 8, 8], strides = [1, 1, 1]} : vector<8x9x8xf32> to vector<8x8x8xf32>
    %17 = vector.shape_cast %16 : vector<8x8x8xf32> to vector<64x8xf32>
    %18 = vector.extract_strided_slice %3 {offsets = [0, 1, 0], sizes = [8, 8, 4], strides = [1, 1, 1]} : vector<8x9x8xf32> to vector<8x8x4xf32>
    %19 = vector.shape_cast %18 : vector<8x8x4xf32> to vector<64x4xf32>
    %c0_11 = arith.constant 0 : index
    %c0_12 = arith.constant 0 : index
    %c0_13 = arith.constant 0 : index
    %20 = vector.load %arg4[%c0_11, %c0_12, %c0_13] : memref<3x8x4xf32, #tpu.memory_space<vmem>>, vector<1x8x4xf32>
    %21 = vector.shape_cast %20 : vector<1x8x4xf32> to vector<8x4xf32>
    %cst = arith.constant dense<0.000000e+00> : vector<64x4xf32>
    %22 = tpu.matmul %17, %21, %cst {dimension_numbers = #tpu.dot_dimension_numbers<[1], [0], [0], [1], [0, 0, 1, 1], [], []>} : vector<64x8xf32>, vector<8x4xf32>, vector<64x4xf32> -> vector<64x4xf32>
    %23 = arith.addf %15, %22 : vector<64x4xf32>
    %c0_14 = arith.constant 0 : index
    %c0_15 = arith.constant 0 : index
    %c0_16 = arith.constant 0 : index
    %24 = vector.load %arg5[%c0_14, %c0_15, %c0_16] : memref<3x4x4xf32, #tpu.memory_space<vmem>>, vector<1x4x4xf32>
    %25 = vector.shape_cast %24 : vector<1x4x4xf32> to vector<4x4xf32>
    %cst_17 = arith.constant dense<0.000000e+00> : vector<64x4xf32>
    %26 = tpu.matmul %19, %25, %cst_17 {dimension_numbers = #tpu.dot_dimension_numbers<[1], [0], [0], [1], [0, 0, 1, 1], [], []>} : vector<64x4xf32>, vector<4x4xf32>, vector<64x4xf32> -> vector<64x4xf32>
    %27 = arith.addf %23, %26 : vector<64x4xf32>
    %28 = vector.extract_strided_slice %5 {offsets = [0, 0, 0], sizes = [8, 8, 8], strides = [1, 1, 1]} : vector<8x9x8xf32> to vector<8x8x8xf32>
    %29 = vector.shape_cast %28 : vector<8x8x8xf32> to vector<64x8xf32>
    %30 = vector.extract_strided_slice %5 {offsets = [0, 1, 0], sizes = [8, 8, 4], strides = [1, 1, 1]} : vector<8x9x8xf32> to vector<8x8x4xf32>
    %31 = vector.shape_cast %30 : vector<8x8x4xf32> to vector<64x4xf32>
    %c1 = arith.constant 1 : index
    %c0_18 = arith.constant 0 : index
    %c0_19 = arith.constant 0 : index
    %32 = vector.load %arg4[%c1, %c0_18, %c0_19] : memref<3x8x4xf32, #tpu.memory_space<vmem>>, vector<1x8x4xf32>
    %33 = vector.shape_cast %32 : vector<1x8x4xf32> to vector<8x4xf32>
    %cst_20 = arith.constant dense<0.000000e+00> : vector<64x4xf32>
    %34 = tpu.matmul %29, %33, %cst_20 {dimension_numbers = #tpu.dot_dimension_numbers<[1], [0], [0], [1], [0, 0, 1, 1], [], []>} : vector<64x8xf32>, vector<8x4xf32>, vector<64x4xf32> -> vector<64x4xf32>
    %35 = arith.addf %27, %34 : vector<64x4xf32>
    %c1_21 = arith.constant 1 : index
    %c0_22 = arith.constant 0 : index
    %c0_23 = arith.constant 0 : index
    %36 = vector.load %arg5[%c1_21, %c0_22, %c0_23] : memref<3x4x4xf32, #tpu.memory_space<vmem>>, vector<1x4x4xf32>
    %37 = vector.shape_cast %36 : vector<1x4x4xf32> to vector<4x4xf32>
    %cst_24 = arith.constant dense<0.000000e+00> : vector<64x4xf32>
    %38 = tpu.matmul %31, %37, %cst_24 {dimension_numbers = #tpu.dot_dimension_numbers<[1], [0], [0], [1], [0, 0, 1, 1], [], []>} : vector<64x4xf32>, vector<4x4xf32>, vector<64x4xf32> -> vector<64x4xf32>
    %39 = arith.addf %35, %38 : vector<64x4xf32>
    %40 = vector.extract_strided_slice %12 {offsets = [0, 0, 0], sizes = [8, 8, 8], strides = [1, 1, 1]} : vector<8x9x8xf32> to vector<8x8x8xf32>
    %41 = vector.shape_cast %40 : vector<8x8x8xf32> to vector<64x8xf32>
    %42 = vector.extract_strided_slice %12 {offsets = [0, 1, 0], sizes = [8, 8, 4], strides = [1, 1, 1]} : vector<8x9x8xf32> to vector<8x8x4xf32>
    %43 = vector.shape_cast %42 : vector<8x8x4xf32> to vector<64x4xf32>
    %c2 = arith.constant 2 : index
    %c0_25 = arith.constant 0 : index
    %c0_26 = arith.constant 0 : index
    %44 = vector.load %arg4[%c2, %c0_25, %c0_26] : memref<3x8x4xf32, #tpu.memory_space<vmem>>, vector<1x8x4xf32>
    %45 = vector.shape_cast %44 : vector<1x8x4xf32> to vector<8x4xf32>
    %cst_27 = arith.constant dense<0.000000e+00> : vector<64x4xf32>
    %46 = tpu.matmul %41, %45, %cst_27 {dimension_numbers = #tpu.dot_dimension_numbers<[1], [0], [0], [1], [0, 0, 1, 1], [], []>} : vector<64x8xf32>, vector<8x4xf32>, vector<64x4xf32> -> vector<64x4xf32>
    %47 = arith.addf %39, %46 : vector<64x4xf32>
    %c2_28 = arith.constant 2 : index
    %c0_29 = arith.constant 0 : index
    %c0_30 = arith.constant 0 : index
    %48 = vector.load %arg5[%c2_28, %c0_29, %c0_30] : memref<3x4x4xf32, #tpu.memory_space<vmem>>, vector<1x4x4xf32>
    %49 = vector.shape_cast %48 : vector<1x4x4xf32> to vector<4x4xf32>
    %cst_31 = arith.constant dense<0.000000e+00> : vector<64x4xf32>
    %50 = tpu.matmul %43, %49, %cst_31 {dimension_numbers = #tpu.dot_dimension_numbers<[1], [0], [0], [1], [0, 0, 1, 1], [], []>} : vector<64x4xf32>, vector<4x4xf32>, vector<64x4xf32> -> vector<64x4xf32>
    %51 = arith.addf %47, %50 : vector<64x4xf32>
    %52 = tpu.transpose %51, [1, 0] : vector<64x4xf32> -> vector<4x64xf32>
    %c0_32 = arith.constant 0 : index
    %c0_33 = arith.constant 0 : index
    %c0_34 = arith.constant 0 : index
    %53 = vector.load %arg7[%c0_32, %c0_33, %c0_34] : memref<1x4x64xf32, #tpu.memory_space<vmem>>, vector<1x4x64xf32>
    %54 = vector.shape_cast %53 : vector<1x4x64xf32> to vector<4x64xf32>
    %55 = vector.shape_cast %52 : vector<4x64xf32> to vector<1x4x64xf32>
    tpu.vector_store %arg7[%c0_32, %c0_33, %c0_34], %55 {strides = array<i32>} : memref<1x4x64xf32, #tpu.memory_space<vmem>>, vector<1x4x64xf32>,
    return
  }
  func.func @transform_0(%arg0: i32, %arg1: i32) -> (i32, i32, i32, i32, i32) {
    %c0_i32 = arith.constant 0 : i32
    %c0_i32_0 = arith.constant 0 : i32
    %c0_i32_1 = arith.constant 0 : i32
    %c0_i32_2 = arith.constant 0 : i32
    return %arg0, %arg1, %c0_i32, %c0_i32_0, %c0_i32_1 : i32, i32, i32, i32, i32
  }
  func.func @transform_1(%arg0: i32, %arg1: i32) -> (i32, i32, i32, i32, i32) {
    %c1_i32 = arith.constant 1 : i32
    %0 = arith.addi %arg1, %c1_i32 : i32
    %c8_i32 = arith.constant 8 : i32
    %1 = arith.muli %0, %c8_i32 : i32
    %c0_i32 = arith.constant 0 : i32
    %c0_i32_0 = arith.constant 0 : i32
    %c0_i32_1 = arith.constant 0 : i32
    %c0_i32_2 = arith.constant 0 : i32
    return %arg0, %1, %c0_i32, %c0_i32_0, %c0_i32_1 : i32, i32, i32, i32, i32
  }
  func.func @transform_2(%arg0: i32, %arg1: i32) -> (i32, i32, i32) {
    %c0_i32 = arith.constant 0 : i32
    %c0_i32_0 = arith.constant 0 : i32
    %c0_i32_1 = arith.constant 0 : i32
    %c0_i32_2 = arith.constant 0 : i32
    return %c0_i32, %c0_i32_0, %c0_i32_1 : i32, i32, i32
  }
  func.func @transform_3(%arg0: i32, %arg1: i32) -> (i32, i32, i32) {
    %c0_i32 = arith.constant 0 : i32
    %c0_i32_0 = arith.constant 0 : i32
    %c0_i32_1 = arith.constant 0 : i32
    %c0_i32_2 = arith.constant 0 : i32
    return %c0_i32, %c0_i32_0, %c0_i32_1 : i32, i32, i32
  }
  func.func @transform_4(%arg0: i32, %arg1: i32) -> (i32, i32) {
    %c0_i32 = arith.constant 0 : i32
    %c0_i32_0 = arith.constant 0 : i32
    %c0_i32_1 = arith.constant 0 : i32
    return %c0_i32, %c0_i32_0 : i32, i32
  }
  func.func @transform_5(%arg0: i32, %arg1: i32) -> (i32, i32, i32) {
    %c0_i32 = arith.constant 0 : i32
    %c0_i32_0 = arith.constant 0 : i32
    return %arg0, %c0_i32, %arg1 : i32, i32, i32
  }
}

</mosaic_0001>

<llo_original>
// kernel: tpu_custom_call.1
$region0: #{tpu_custom_call.1}
  #allocation0 [shape = 'u32[]', space=smem, size = 0x4, offset = 0x4, fixed_abs, tag = 'smem constant byte address 0x4 - core index']
  #allocation1 [shape = 'u32[144,128]{1,0:T(1,128)}', space=vmem, size = 0x12000, scoped, tag = 'internal scratch']
  %s0 = inlined_call_operand.vmem [shape: f32[2,9,2,9,8], index: 0, kind: input, shape index: {}]
  %s1 = inlined_call_operand.vmem [shape: f32[2,9,2,9,8], index: 1, kind: input, shape index: {}]
  %s2 = inlined_call_operand.vmem [shape: f32[3,8,4], index: 2, kind: input, shape index: {}]
  %s3 = inlined_call_operand.vmem [shape: f32[3,4,4], index: 3, kind: input, shape index: {}]
  %s4 = inlined_call_operand.vmem [shape: f32[1,4], index: 4, kind: input, shape index: {}]
  %s5 = inlined_call_operand.hbm [shape: f32[2,4,64], index: 5, kind: output, shape index: {}]
  %s6 = sld [smem:[#allocation0]]
  $region53: #{tpu_custom_call.1} parent=0
    _
  %s8 = ssub.s32 1, %s6
  %s9 = scalar_select 0, %s8, %s6
  $region1: #{tpu_custom_call.1} parent=0
    #allocation2 [shape = 'u8[4096]{0}', space=vmem, size = 0x1000, scoped, tag = 'output window, operand 0']
    #allocation3 [shape = 's32[2]{0}', space=sflag, size = 0x8, scoped, tag = 'scoped memory for tpu_custom_call.1']
    %10 = vsyncpa [#allocation3], 0
    %s11 = scalar_lea.sflag [#allocation3], 1
    %12 = vsyncpa %s11, 0
    loop: start=0, step=1, limit=4
    $region2: #{tpu_custom_call.1} parent=1 // loop_pre_header
      _
    $region3: #{tpu_custom_call.1} parent=1 // loop_header
      %s14 = sphi 0, %s18
      %p15 = scmp.ge.s32.totalorder %s14, 4
      %s21 = sphi 0, %s33
      %s22 = sphi 0, %s29
      %s23 = sphi 0, %s21
      %s24 = sphi 0, %s22
      %s25 = sphi 0, %s23
      %s26 = sphi 0, %s24
      %s38 = sphi 0, %s40
      %s41 = sphi 0, %s38
      %s42 = sphi 0, %s41
      %s58 = sphi 0, %s42
      %s70 = sphi 0, %s72
      %s73 = sphi 0, %s70
      %s74 = sphi 0, %s73
      %s90 = sphi 0, %s74
      %s94 = sphi 0, %s94
      %s96 = sphi 0, %s94
      %s97 = sphi 0, %s96
      %s111 = sphi 0, %s97
      %s115 = sphi 0, %s115
      %s117 = sphi 0, %s115
      %s118 = sphi 0, %s117
      %s132 = sphi 0, %s118
      %s136 = sphi 0, %s136
      %s138 = sphi 0, %s136
      %s139 = sphi 0, %s138
      %s153 = sphi 0, %s139
      %s161 = sphi 0, %s163
      %s164 = sphi 0, %s161
      %s165 = sphi 0, %s164
      %s181 = sphi 0, %s165
    $region4: #{tpu_custom_call.1} parent=1 // loop_header_branch
      %17 = sbr.rel (%p15) target = $region8
    $region5: #{tpu_custom_call.1} parent=1 // loop_body
      %s19 = ssub.s32 %s14, 1
      %s20 = ssub.s32 %s14, 2
      %s27 = sadd.s32 1, %s22
      %p28 = scmp.ge.s32.totalorder %s27, 1
      %s29 = scalar_select %p28, 0, %s27
      %s30 = sadd.s32 1, %s21
      %s31 = scalar_select %p28, %s30, %s21
      %p32 = scmp.ge.s32.totalorder %s31, 2
      %s33 = scalar_select %p32, 0, %s31
      %s34 = ssub.s32 %s21, %s33
      %s35 = ssub.s32 %s22, %s29
      %s36 = sor.u32 %s34, %s35
      %p37 = scmp.eq.s32.totalorder %s36, 0
      %s39 = sadd.s32 %s38, 1
      %s40 = scalar_select %p37, %s38, %s39
      %p43 = pneg %p37
      %p44 = scmp.eq.s32.totalorder %s14, 1
      %p45 = por %p43, %p44
      %p46 = scmp.ne.s32.totalorder %s38, %s41
      %p47 = scmp.eq.s32.totalorder %s14, 0
      %p48 = por %p46, %p47
      %p49 = scmp.ne.s32.totalorder %s38, %s41
      %p50 = scmp.eq.s32.totalorder %s19, 1
      %p51 = por %p49, %p50
      %p52 = scmp.ne.s32.totalorder %s41, %s42
      %p53 = scmp.eq.s32.totalorder %s19, 0
      %p54 = por %p52, %p53
      %p55 = scmp.ne.s32.totalorder %s41, %s42
      %p56 = scmp.eq.s32.totalorder %s20, 1
      %p57 = por %p55, %p56
      %p59 = scmp.ne.s32.totalorder %s42, %s58
      %p60 = scmp.eq.s32.totalorder %s20, 0
      %p61 = por %p59, %p60
      %s62 = sadd.s32 %s22, 1
      %s63 = smul.u32 %s62, 8
      %s64 = sadd.s32 %s29, 1
      %s65 = smul.u32 %s64, 8
      %s66 = ssub.s32 %s21, %s33
      %s67 = ssub.s32 %s63, %s65
      %s68 = sor.u32 %s66, %s67
      %p69 = scmp.eq.s32.totalorder %s68, 0
      %s71 = sadd.s32 %s70, 1
      %s72 = scalar_select %p69, %s70, %s71
      %p75 = pneg %p69
      %p76 = scmp.eq.s32.totalorder %s14, 1
      %p77 = por %p75, %p76
      %p78 = scmp.ne.s32.totalorder %s70, %s73
      %p79 = scmp.eq.s32.totalorder %s14, 0
      %p80 = por %p78, %p79
      %p81 = scmp.ne.s32.totalorder %s70, %s73
      %p82 = scmp.eq.s32.totalorder %s19, 1
      %p83 = por %p81, %p82
      %p84 = scmp.ne.s32.totalorder %s73, %s74
      %p85 = scmp.eq.s32.totalorder %s19, 0
      %p86 = por %p84, %p85
      %p87 = scmp.ne.s32.totalorder %s73, %s74
      %p88 = scmp.eq.s32.totalorder %s20, 1
      %p89 = por %p87, %p88
      %p91 = scmp.ne.s32.totalorder %s74, %s90
      %p92 = scmp.eq.s32.totalorder %s20, 0
      %p93 = por %p91, %p92
      %s95 = sadd.s32 %s94, 1
      %p98 = scmp.eq.s32.totalorder %s14, 1
      %p99 = scmp.ne.s32.totalorder %s94, %s96
      %p100 = scmp.eq.s32.totalorder %s14, 0
      %p101 = por %p99, %p100
      %p102 = scmp.ne.s32.totalorder %s94, %s96
      %p103 = scmp.eq.s32.totalorder %s19, 1
      %p104 = por %p102, %p103
      %p105 = scmp.ne.s32.totalorder %s96, %s97
      %p106 = scmp.eq.s32.totalorder %s19, 0
      %p107 = por %p105, %p106
      %p108 = scmp.ne.s32.totalorder %s96, %s97
      %p109 = scmp.eq.s32.totalorder %s20, 1
      %p110 = por %p108, %p109
      %p112 = scmp.ne.s32.totalorder %s97, %s111
      %p113 = scmp.eq.s32.totalorder %s20, 0
      %p114 = por %p112, %p113
      %s116 = sadd.s32 %s115, 1
      %p119 = scmp.eq.s32.totalorder %s14, 1
      %p120 = scmp.ne.s32.totalorder %s115, %s117
      %p121 = scmp.eq.s32.totalorder %s14, 0
      %p122 = por %p120, %p121
      %p123 = scmp.ne.s32.totalorder %s115, %s117
      %p124 = scmp.eq.s32.totalorder %s19, 1
      %p125 = por %p123, %p124
      %p126 = scmp.ne.s32.totalorder %s117, %s118
      %p127 = scmp.eq.s32.totalorder %s19, 0
      %p128 = por %p126, %p127
      %p129 = scmp.ne.s32.totalorder %s117, %s118
      %p130 = scmp.eq.s32.totalorder %s20, 1
      %p131 = por %p129, %p130
      %p133 = scmp.ne.s32.totalorder %s118, %s132
      %p134 = scmp.eq.s32.totalorder %s20, 0
      %p135 = por %p133, %p134
      %s137 = sadd.s32 %s136, 1
      %p140 = scmp.eq.s32.totalorder %s14, 1
      %p141 = scmp.ne.s32.totalorder %s136, %s138
      %p142 = scmp.eq.s32.totalorder %s14, 0
      %p143 = por %p141, %p142
      %p144 = scmp.ne.s32.totalorder %s136, %s138
      %p145 = scmp.eq.s32.totalorder %s19, 1
      %p146 = por %p144, %p145
      %p147 = scmp.ne.s32.totalorder %s138, %s139
      %p148 = scmp.eq.s32.totalorder %s19, 0
      %p149 = por %p147, %p148
      %p150 = scmp.ne.s32.totalorder %s138, %s139
      %p151 = scmp.eq.s32.totalorder %s20, 1
      %p152 = por %p150, %p151
      %p154 = scmp.ne.s32.totalorder %s139, %s153
      %p155 = scmp.eq.s32.totalorder %s20, 0
      %p156 = por %p154, %p155
      %s157 = ssub.s32 %s21, %s33
      %s158 = ssub.s32 %s22, %s29
      %s159 = sor.u32 %s157, %s158
      %p160 = scmp.eq.s32.totalorder %s159, 0
      %s162 = sadd.s32 %s161, 1
      %s163 = scalar_select %p160, %s161, %s162
      %p166 = pneg %p160
      %p167 = scmp.eq.s32.totalorder %s14, 1
      %p168 = por %p166, %p167
      %p169 = scmp.ne.s32.totalorder %s161, %s164
      %p170 = scmp.eq.s32.totalorder %s14, 0
      %p171 = por %p169, %p170
      %p172 = scmp.ne.s32.totalorder %s161, %s164
      %p173 = scmp.eq.s32.totalorder %s19, 1
      %p174 = por %p172, %p173
      %p175 = scmp.ne.s32.totalorder %s164, %s165
      %p176 = scmp.eq.s32.totalorder %s19, 0
      %p177 = por %p175, %p176
      %p178 = scmp.ne.s32.totalorder %s164, %s165
      %p179 = scmp.eq.s32.totalorder %s20, 1
      %p180 = por %p178, %p179
      %p182 = scmp.ne.s32.totalorder %s165, %s181
      %p183 = scmp.eq.s32.totalorder %s20, 0
      %p184 = por %p182, %p183
      %p185 = scmp.le.s32.totalorder 1, %s14
      %p186 = scmp.lt.s32.totalorder %s14, 3
      %p187 = pnand %p185, %p186
      %p188 = pneg %p187
      // Predicated region
      $region9: #{tpu_custom_call.1} parent=5 // pred_check
        _
      $region10: #{tpu_custom_call.1} parent=5 // pred_check_branch
        %190 = sbr.rel (%p187) target = $region12
      $region11: #{tpu_custom_call.1} parent=5 // pred_region
        %s191 = ssub.s32 %s14, 1
        // Predicated region
        $region13: #{tpu_custom_call.1} parent=11 // pred_check
          %p192 = pneg %p107
        $region14: #{tpu_custom_call.1} parent=11 // pred_check_branch
          %194 = sbr.rel (%p192) target = $region16
        $region15: #{tpu_custom_call.1} parent=11 // pred_region
          _
        $region16: #{tpu_custom_call.1} parent=11 // pred_fallthru
          _
        // Predicated region
        $region17: #{tpu_custom_call.1} parent=11 // pred_check
          %p195 = pneg %p128
        $region18: #{tpu_custom_call.1} parent=11 // pred_check_branch
          %197 = sbr.rel (%p195) target = $region20
        $region19: #{tpu_custom_call.1} parent=11 // pred_region
          _
        $region20: #{tpu_custom_call.1} parent=11 // pred_fallthru
          _
        // Predicated region
        $region21: #{tpu_custom_call.1} parent=11 // pred_check
          %p198 = pneg %p149
        $region22: #{tpu_custom_call.1} parent=11 // pred_check_branch
          %200 = sbr.rel (%p198) target = $region24
        $region23: #{tpu_custom_call.1} parent=11 // pred_region
          _
        $region24: #{tpu_custom_call.1} parent=11 // pred_fallthru
          _
      $region12: #{tpu_custom_call.1} parent=5 // pred_fallthru
        _
      %p201 = scmp.lt.s32.totalorder %s14, 2
      // Predicated region
      $region25: #{tpu_custom_call.1} parent=5 // pred_check
        %p202 = pneg %p201
      $region26: #{tpu_custom_call.1} parent=5 // pred_check_branch
        %204 = sbr.rel (%p202) target = $region28
      $region27: #{tpu_custom_call.1} parent=5 // pred_region
        // Predicated region
        $region29: #{tpu_custom_call.1} parent=27 // pred_check
          %p205 = pneg %p48
        $region30: #{tpu_custom_call.1} parent=27 // pred_check_branch
          %207 = sbr.rel (%p205) target = $region32
        $region31: #{tpu_custom_call.1} parent=27 // pred_region
          %s208 = smul.u32 8, %s22
          %s209 = ssub.s32 9, %s208
          %p210 = scmp.lt.s32.totalorder %s209, 8
          %s211 = scalar_select %p210, %s209, 8
          %s212 = smul.u32 128, %s211
          %s213 = smul.u32 %s212, 2
          %s214 = smul.u32 %s213, 2
          %p215 = scmp.lt.s32.totalorder %s21, 1
          %s216 = scalar_select %p215, %s21, 1
          %p217 = scmp.lt.s32.totalorder %s208, 8
          %s218 = scalar_select %p217, %s208, 8
          %s219 = smul.addr %s218, 4
          %s220 = smul.addr %s216, 36
          %s221 = sadd.s32 %s219, %s220
          %s222 = smul.addr %s221, 8
          %s223 = scalar_lea.vmem %s0, %s222
          %s224 = smul.u32 8, %s22
          %s225 = ssub.s32 9, %s224
          %p226 = scmp.lt.s32.totalorder %s225, 8
          %s227 = scalar_select %p226, %s225, 8
          %s228 = smul.u32 128, %s227
          %s229 = smul.u32 %s228, 2
          %s230 = smul.u32 %s229, 2
        $region32: #{tpu_custom_call.1} parent=27 // pred_fallthru
          _
        // Predicated region
        $region33: #{tpu_custom_call.1} parent=27 // pred_check
          %p231 = pneg %p80
        $region34: #{tpu_custom_call.1} parent=27 // pred_check_branch
          %233 = sbr.rel (%p231) target = $region36
        $region35: #{tpu_custom_call.1} parent=27 // pred_region
          %s234 = sadd.s32 %s22, 1
          %s235 = smul.u32 %s234, 8
          %p236 = scmp.lt.s32.totalorder %s21, 1
          %s237 = scalar_select %p236, %s21, 1
          %p238 = scmp.lt.s32.totalorder %s235, 8
          %s239 = scalar_select %p238, %s235, 8
          %s240 = smul.addr %s239, 4
          %s241 = smul.addr %s237, 36
          %s242 = sadd.s32 %s240, %s241
          %s243 = smul.addr %s242, 8
          %s244 = scalar_lea.vmem %s1, %s243
          %s245 = sadd.s32 %s22, 1
          %s246 = smul.u32 %s245, 8
        $region36: #{tpu_custom_call.1} parent=27 // pred_fallthru
          _
      $region28: #{tpu_custom_call.1} parent=5 // pred_fallthru
        _
      %p247 = scmp.le.s32.totalorder 1, %s14
      %p248 = scmp.lt.s32.totalorder %s14, 3
      %p249 = pnand %p247, %p248
      %p250 = pneg %p249
      // Predicated region
      $region37: #{tpu_custom_call.1} parent=5 // pred_check
        _
      $region38: #{tpu_custom_call.1} parent=5 // pred_check_branch
        %252 = sbr.rel (%p249) target = $region40
      $region39: #{tpu_custom_call.1} parent=5 // pred_region
        %s253 = ssub.s32 %s14, 1
        %s254 = smul.u32 8, %s24
        %s255 = ssub.s32 9, %s254
        %p256 = scmp.lt.s32.totalorder %s255, 8
        %s257 = scalar_select %p256, %s255, 8
        %s258 = smul.u32 128, %s257
        %s259 = smul.u32 %s258, 2
        %s260 = smul.u32 %s259, 2
        %p261 = scmp.lt.s32.totalorder %s23, 1
        %s262 = scalar_select %p261, %s23, 1
        %p263 = scmp.lt.s32.totalorder %s254, 8
        %s264 = scalar_select %p263, %s254, 8
        %s265 = smul.addr %s264, 4
        %s266 = smul.addr %s262, 36
        %s267 = sadd.s32 %s265, %s266
        %s268 = smul.addr %s267, 8
        %s269 = scalar_lea.vmem %s0, %s268
        %p270 = pneg %p54
        %p271 = pneg %p51
        %s272 = sadd.s32 %s24, 1
        %s273 = smul.u32 %s272, 8
        %p274 = scmp.lt.s32.totalorder %s23, 1
        %s275 = scalar_select %p274, %s23, 1
        %p276 = scmp.lt.s32.totalorder %s273, 8
        %s277 = scalar_select %p276, %s273, 8
        %s278 = smul.addr %s277, 4
        %s279 = smul.addr %s275, 36
        %s280 = sadd.s32 %s278, %s279
        %s281 = smul.addr %s280, 8
        %s282 = scalar_lea.vmem %s1, %s281
        %p283 = pneg %p86
        %p284 = pneg %p83
        %p285 = pneg %p107
        %p286 = pneg %p104
        %p287 = pneg %p128
        %p288 = pneg %p125
        %p289 = pneg %p149
        %p290 = pneg %p146
        %p291 = pneg %p177
        %p292 = pneg %p174
        %s293 = sand.u32 %s164, 1
        %s294 = scalar_lea.sflag [#allocation3], %s293
        %s295 = sand.u32 %s164, 1
        %s296 = smul.addr %s295, 4
        %s297 = scalar_lea.vmem [#allocation2], %s296
        %s298 = smul.u32 8, %s24
        %s299 = ssub.s32 9, %s298
        %p300 = scmp.lt.s32.totalorder %s299, 8
        %s301 = scalar_select %p300, %s299, 8
        %s302 = smul.u32 128, %s301
        %s303 = smul.u32 %s302, 2
        %s304 = smul.u32 %s303, 2
        %p305 = scmp.lt.s32.totalorder %s23, 1
        %s306 = scalar_select %p305, %s23, 1
        %p307 = scmp.lt.s32.totalorder %s298, 8
        %s308 = scalar_select %p307, %s298, 8
        %s309 = smul.addr %s308, 4
        %s310 = smul.addr %s306, 36
        %s311 = sadd.s32 %s309, %s310
        %s312 = smul.addr %s311, 8
        %s313 = scalar_lea.vmem %s0, %s312
        %s314 = smul.u32 8, %s24
        %s315 = ssub.s32 9, %s314
        %p316 = scmp.lt.s32.totalorder %s315, 8
        %s317 = scalar_select %p316, %s315, 8
        %s318 = smul.u32 128, %s317
        %s319 = smul.u32 %s318, 2
        %s320 = smul.u32 %s319, 2
        %s321 = sadd.s32 %s24, 1
        %s322 = smul.u32 %s321, 8
        %p323 = scmp.lt.s32.totalorder %s23, 1
        %s324 = scalar_select %p323, %s23, 1
        %p325 = scmp.lt.s32.totalorder %s322, 8
        %s326 = scalar_select %p325, %s322, 8
        %s327 = smul.addr %s326, 4
        %s328 = smul.addr %s324, 36
        %s329 = sadd.s32 %s327, %s328
        %s330 = smul.addr %s329, 8
        %s331 = scalar_lea.vmem %s1, %s330
        %s332 = sadd.s32 %s24, 1
        %s333 = smul.u32 %s332, 8
        %v334 = vld [vmem:[%s313] sm:$0xff]
        %v335 = vld [vmem:[%s313 + $0x8] sm:$0x1]
        %v336 = vld [vmem:[%s313 + $0x10] sm:$0xff]
        %v337 = vld [vmem:[%s313 + $0x18] sm:$0x1]
        %v338 = vld [vmem:[%s313 + $0x20] sm:$0xff]
        %v339 = vld [vmem:[%s313 + $0x28] sm:$0x1]
        %v340 = vld [vmem:[%s313 + $0x30] sm:$0xff]
        %v341 = vld [vmem:[%s313 + $0x38] sm:$0x1]
        %v342 = vld [vmem:[%s313 + $0x40] sm:$0xff]
        %v343 = vld [vmem:[%s313 + $0x48] sm:$0x1]
        %v344 = vld [vmem:[%s313 + $0x50] sm:$0xff]
        %v345 = vld [vmem:[%s313 + $0x58] sm:$0x1]
        %v346 = vld [vmem:[%s313 + $0x60] sm:$0xff]
        %v347 = vld [vmem:[%s313 + $0x68] sm:$0x1]
        %v348 = vld [vmem:[%s313 + $0x70] sm:$0xff]
        %v349 = vld [vmem:[%s313 + $0x78] sm:$0x1]
        %v350 = vld [vmem:[%s313 + $0x80] sm:$0xff]
        %v351 = vld [vmem:[%s313 + $0x88] sm:$0x1]
        %v352 = vld [vmem:[%s313 + $0x90] sm:$0xff]
        %v353 = vld [vmem:[%s313 + $0x98] sm:$0x1]
        %v354 = vld [vmem:[%s313 + $0xa0] sm:$0xff]
        %v355 = vld [vmem:[%s313 + $0xa8] sm:$0x1]
        %v356 = vld [vmem:[%s313 + $0xb0] sm:$0xff]
        %v357 = vld [vmem:[%s313 + $0xb8] sm:$0x1]
        %v358 = vld [vmem:[%s313 + $0xc0] sm:$0xff]
        %v359 = vld [vmem:[%s313 + $0xc8] sm:$0x1]
        %v360 = vld [vmem:[%s313 + $0xd0] sm:$0xff]
        %v361 = vld [vmem:[%s313 + $0xd8] sm:$0x1]
        %v362 = vld [vmem:[%s313 + $0xe0] sm:$0xff]
        %v363 = vld [vmem:[%s313 + $0xe8] sm:$0x1]
        %v364 = vld [vmem:[%s313 + $0xf0] sm:$0xff]
        %v365 = vld [vmem:[%s313 + $0xf8] sm:$0x1]
        %v366 = vld [vmem:[%s331] sm:$0xff]
        %v367 = vld [vmem:[%s331 + $0x8] sm:$0x1]
        %v368 = vld [vmem:[%s4] sm:$0x1]
        %v370 = vlaneseq
        %v371 = vshrl.u32 %v370, 7
        %v372 = vsub.s32 0, %v371
        %v373 = vrot.slane %v368, %v372
        %vm391 = vcmask 1046528
        %v392 = vrot.slane %v334, 1
        %v393 = vrot.slane %v335, 1
        %v394 = vsel %vm391, %v392, %v393
        %v395 = vrot.slane %v338, 1
        %v396 = vrot.slane %v339, 1
        %v397 = vsel %vm391, %v395, %v396
        %v398 = vrot.slane %v342, 1
        %v399 = vrot.slane %v343, 1
        %v400 = vsel %vm391, %v398, %v399
        %v401 = vrot.slane %v346, 1
        %v402 = vrot.slane %v347, 1
        %v403 = vsel %vm391, %v401, %v402
        %v404 = vrot.slane %v350, 1
        %v405 = vrot.slane %v351, 1
        %v406 = vsel %vm391, %v404, %v405
        %v407 = vrot.slane %v354, 1
        %v408 = vrot.slane %v355, 1
        %v409 = vsel %vm391, %v407, %v408
        %v410 = vrot.slane %v358, 1
        %v411 = vrot.slane %v359, 1
        %v412 = vsel %vm391, %v410, %v411
        %v413 = vrot.slane %v362, 1
        %v414 = vrot.slane %v363, 1
        %v415 = vsel %vm391, %v413, %v414
        %v416 = vld [vmem:[%s2] sm:$0xff]
        %vm417 = vcmask 64512
        %v418 = vsel %vm417, %v334, 0
        %v420 = vsel %vm417, %v338, 0
        %v422 = vsel %vm417, %v342, 0
        %v424 = vsel %vm417, %v346, 0
        %v426 = vsel %vm417, %v350, 0
        %v428 = vsel %vm417, %v354, 0
        %v430 = vsel %vm417, %v358, 0
        %v432 = vsel %vm417, %v362, 0
        %434 = vmatprep.subr.mxu0 0.0
        %435 = vmatpush1.msra.mxu0 0.0
        %436 = vmatprep.subr.mxu0 0.0
        %437 = vmatpush1.msra.mxu0 0.0
        %438 = vmatprep.subr.mxu0 0.0
        %439 = vmatpush1.msra.mxu0 0.0
        %440 = vmatprep.subr.mxu0 0.0
        %441 = vmatpush1.msra.mxu0 0.0
        %442 = vmatprep.subr.mxu0 0.0
        %443 = vmatpush1.msra.mxu0 0.0
        %444 = vmatprep.subr.mxu0 0.0
        %445 = vmatpush1.msra.mxu0 0.0
        %446 = vmatprep.subr.mxu0 0.0
        %447 = vmatpush1.msra.mxu0 0.0
        %448 = vmatprep.subr.mxu0 0.0
        %449 = vmatpush1.msra.mxu0 0.0
        %450 = vmatprep.subr.mxu0 0.0
        %451 = vmatpush1.msra.mxu0 0.0
        %452 = vmatprep.subr.mxu0 0.0
        %453 = vmatpush1.msra.mxu0 0.0
        %454 = vmatprep.subr.mxu0 0.0
        %455 = vmatpush1.msra.mxu0 0.0
        %456 = vmatprep.subr.mxu0 0.0
        %457 = vmatpush1.msra.mxu0 0.0
        %458 = vmatprep.subr.mxu0 0.0
        %459 = vmatpush1.msra.mxu0 0.0
        %460 = vmatprep.subr.mxu0 0.0
        %461 = vmatpush1.msra.mxu0 0.0
        %462 = vmatprep.subr.mxu0 0.0
        %463 = vmatpush1.msra.mxu0 0.0
        %464 = vmatprep.subr.mxu0 0.0
        %465 = vmatpush1.msra.mxu0 %v416
        %466 = vmatprep.subr.mxu0 0.0
        %467 = vmatpush2.msra.mxu0 0.0
        %468 = vmatprep.subr.mxu0 0.0
        %469 = vmatpush2.msra.mxu0 0.0
        %470 = vmatprep.subr.mxu0 0.0
        %471 = vmatpush2.msra.mxu0 0.0
        %472 = vmatprep.subr.mxu0 0.0
        %473 = vmatpush2.msra.mxu0 0.0
        %474 = vmatprep.subr.mxu0 0.0
        %475 = vmatpush2.msra.mxu0 0.0
        %476 = vmatprep.subr.mxu0 0.0
        %477 = vmatpush2.msra.mxu0 0.0
        %478 = vmatprep.subr.mxu0 0.0
        %479 = vmatpush2.msra.mxu0 0.0
        %480 = vmatprep.subr.mxu0 0.0
        %481 = vmatpush2.msra.mxu0 0.0
        %482 = vmatprep.subr.mxu0 0.0
        %483 = vmatpush2.msra.mxu0 0.0
        %484 = vmatprep.subr.mxu0 0.0
        %485 = vmatpush2.msra.mxu0 0.0
        %486 = vmatprep.subr.mxu0 0.0
        %487 = vmatpush2.msra.mxu0 0.0
        %488 = vmatprep.subr.mxu0 0.0
        %489 = vmatpush2.msra.mxu0 0.0
        %490 = vmatprep.subr.mxu0 0.0
        %491 = vmatpush2.msra.mxu0 0.0
        %492 = vmatprep.subr.mxu0 0.0
        %493 = vmatpush2.msra.mxu0 0.0
        %494 = vmatprep.subr.mxu0 0.0
        %495 = vmatpush2.msra.mxu0 0.0
        %496 = vmatprep.subr.mxu0 0.0
        %497 = vmatpush2.msra.mxu0 0.0
        %498 = vmatprep.mubr.f32.mxu0 0.0
        %499 = vmatmul.mubr.f32.gmra.mxu0 %v418
        %v500 = vpop.f32.mrf.mxu0
        %v501 = vadd.f32 0.0, %v500
        %v502 = vpop.f32.mrf.mxu0
        %503 = vmatprep.mubr.f32.mxu0 0.0
        %504 = vmatmul.mubr.f32.gmra.mxu0 %v420
        %v505 = vpop.f32.mrf.mxu0
        %v506 = vadd.f32 0.0, %v505
        %v507 = vpop.f32.mrf.mxu0
        %508 = vmatprep.mubr.f32.mxu0 0.0
        %509 = vmatmul.mubr.f32.gmra.mxu0 %v422
        %v510 = vpop.f32.mrf.mxu0
        %v511 = vadd.f32 0.0, %v510
        %v512 = vpop.f32.mrf.mxu0
        %513 = vmatprep.mubr.f32.mxu0 0.0
        %514 = vmatmul.mubr.f32.gmra.mxu0 %v424
        %v515 = vpop.f32.mrf.mxu0
        %v516 = vadd.f32 0.0, %v515
        %v517 = vpop.f32.mrf.mxu0
        %518 = vmatprep.mubr.f32.mxu0 0.0
        %519 = vmatmul.mubr.f32.gmra.mxu0 %v426
        %v520 = vpop.f32.mrf.mxu0
        %v521 = vadd.f32 0.0, %v520
        %v522 = vpop.f32.mrf.mxu0
        %523 = vmatprep.mubr.f32.mxu0 0.0
        %524 = vmatmul.mubr.f32.gmra.mxu0 %v428
        %v525 = vpop.f32.mrf.mxu0
        %v526 = vadd.f32 0.0, %v525
        %v527 = vpop.f32.mrf.mxu0
        %528 = vmatprep.mubr.f32.mxu0 0.0
        %529 = vmatmul.mubr.f32.gmra.mxu0 %v430
        %v530 = vpop.f32.mrf.mxu0
        %v531 = vadd.f32 0.0, %v530
        %v532 = vpop.f32.mrf.mxu0
        %533 = vmatprep.mubr.f32.mxu0 0.0
        %534 = vmatmul.mubr.f32.gmra.mxu0 %v432
        %v535 = vpop.f32.mrf.mxu0
        %v536 = vadd.f32 0.0, %v535
        %v537 = vpop.f32.mrf.mxu0
        %538 = vdwg.mxu0
        %v539 = vadd.f32 %v373, %v501
        %v540 = vadd.f32 %v373, %v506
        %v541 = vadd.f32 %v373, %v511
        %v542 = vadd.f32 %v373, %v516
        %v543 = vadd.f32 %v373, %v521
        %v544 = vadd.f32 %v373, %v526
        %v545 = vadd.f32 %v373, %v531
        %v546 = vadd.f32 %v373, %v536
        %v547 = vld [vmem:[%s3] sm:$0xf]
        %vm548 = vcmask 31744
        %v549 = vsel %vm548, %v394, 0
        %v551 = vsel %vm548, %v397, 0
        %v553 = vsel %vm548, %v400, 0
        %v555 = vsel %vm548, %v403, 0
        %v557 = vsel %vm548, %v406, 0
        %v559 = vsel %vm548, %v409, 0
        %v561 = vsel %vm548, %v412, 0
        %v563 = vsel %vm548, %v415, 0
        %vm565 = vcmask 1043456
        %v567 = vsel %vm565, %v547, 0
        %569 = vmatprep.subr.mxu0 0.0
        %570 = vmatpush1.msra.mxu0 0.0
        %571 = vmatprep.subr.mxu0 0.0
        %572 = vmatpush1.msra.mxu0 0.0
        %573 = vmatprep.subr.mxu0 0.0
        %574 = vmatpush1.msra.mxu0 0.0
        %575 = vmatprep.subr.mxu0 0.0
        %576 = vmatpush1.msra.mxu0 0.0
        %577 = vmatprep.subr.mxu0 0.0
        %578 = vmatpush1.msra.mxu0 0.0
        %579 = vmatprep.subr.mxu0 0.0
        %580 = vmatpush1.msra.mxu0 0.0
        %581 = vmatprep.subr.mxu0 0.0
        %582 = vmatpush1.msra.mxu0 0.0
        %583 = vmatprep.subr.mxu0 0.0
        %584 = vmatpush1.msra.mxu0 0.0
        %585 = vmatprep.subr.mxu0 0.0
        %586 = vmatpush1.msra.mxu0 0.0
        %587 = vmatprep.subr.mxu0 0.0
        %588 = vmatpush1.msra.mxu0 0.0
        %589 = vmatprep.subr.mxu0 0.0
        %590 = vmatpush1.msra.mxu0 0.0
        %591 = vmatprep.subr.mxu0 0.0
        %592 = vmatpush1.msra.mxu0 0.0
        %593 = vmatprep.subr.mxu0 0.0
        %594 = vmatpush1.msra.mxu0 0.0
        %595 = vmatprep.subr.mxu0 0.0
        %596 = vmatpush1.msra.mxu0 0.0
        %597 = vmatprep.subr.mxu0 0.0
        %598 = vmatpush1.msra.mxu0 0.0
        %599 = vmatprep.subr.mxu0 0.0
        %600 = vmatpush1.msra.mxu0 %v567
        %601 = vmatprep.subr.mxu0 0.0
        %602 = vmatpush2.msra.mxu0 0.0
        %603 = vmatprep.subr.mxu0 0.0
        %604 = vmatpush2.msra.mxu0 0.0
        %605 = vmatprep.subr.mxu0 0.0
        %606 = vmatpush2.msra.mxu0 0.0
        %607 = vmatprep.subr.mxu0 0.0
        %608 = vmatpush2.msra.mxu0 0.0
        %609 = vmatprep.subr.mxu0 0.0
        %610 = vmatpush2.msra.mxu0 0.0
        %611 = vmatprep.subr.mxu0 0.0
        %612 = vmatpush2.msra.mxu0 0.0
        %613 = vmatprep.subr.mxu0 0.0
        %614 = vmatpush2.msra.mxu0 0.0
        %615 = vmatprep.subr.mxu0 0.0
        %616 = vmatpush2.msra.mxu0 0.0
        %617 = vmatprep.subr.mxu0 0.0
        %618 = vmatpush2.msra.mxu0 0.0
        %619 = vmatprep.subr.mxu0 0.0
        %620 = vmatpush2.msra.mxu0 0.0
        %621 = vmatprep.subr.mxu0 0.0
        %622 = vmatpush2.msra.mxu0 0.0
        %623 = vmatprep.subr.mxu0 0.0
        %624 = vmatpush2.msra.mxu0 0.0
        %625 = vmatprep.subr.mxu0 0.0
        %626 = vmatpush2.msra.mxu0 0.0
        %627 = vmatprep.subr.mxu0 0.0
        %628 = vmatpush2.msra.mxu0 0.0
        %629 = vmatprep.subr.mxu0 0.0
        %630 = vmatpush2.msra.mxu0 0.0
        %631 = vmatprep.subr.mxu0 0.0
        %632 = vmatpush2.msra.mxu0 0.0
        %633 = vmatprep.mubr.f32.mxu0 0.0
        %634 = vmatmul.mubr.f32.gmra.mxu0 %v549
        %v635 = vpop.f32.mrf.mxu0
        %v636 = vadd.f32 0.0, %v635
        %v637 = vpop.f32.mrf.mxu0
        %638 = vmatprep.mubr.f32.mxu0 0.0
        %639 = vmatmul.mubr.f32.gmra.mxu0 %v551
        %v640 = vpop.f32.mrf.mxu0
        %v641 = vadd.f32 0.0, %v640
        %v642 = vpop.f32.mrf.mxu0
        %643 = vmatprep.mubr.f32.mxu0 0.0
        %644 = vmatmul.mubr.f32.gmra.mxu0 %v553
        %v645 = vpop.f32.mrf.mxu0
        %v646 = vadd.f32 0.0, %v645
        %v647 = vpop.f32.mrf.mxu0
        %648 = vmatprep.mubr.f32.mxu0 0.0
        %649 = vmatmul.mubr.f32.gmra.mxu0 %v555
        %v650 = vpop.f32.mrf.mxu0
        %v651 = vadd.f32 0.0, %v650
        %v652 = vpop.f32.mrf.mxu0
        %653 = vmatprep.mubr.f32.mxu0 0.0
        %654 = vmatmul.mubr.f32.gmra.mxu0 %v557
        %v655 = vpop.f32.mrf.mxu0
        %v656 = vadd.f32 0.0, %v655
        %v657 = vpop.f32.mrf.mxu0
        %658 = vmatprep.mubr.f32.mxu0 0.0
        %659 = vmatmul.mubr.f32.gmra.mxu0 %v559
        %v660 = vpop.f32.mrf.mxu0
        %v661 = vadd.f32 0.0, %v660
        %v662 = vpop.f32.mrf.mxu0
        %663 = vmatprep.mubr.f32.mxu0 0.0
        %664 = vmatmul.mubr.f32.gmra.mxu0 %v561
        %v665 = vpop.f32.mrf.mxu0
        %v666 = vadd.f32 0.0, %v665
        %v667 = vpop.f32.mrf.mxu0
        %668 = vmatprep.mubr.f32.mxu0 0.0
        %669 = vmatmul.mubr.f32.gmra.mxu0 %v563
        %v670 = vpop.f32.mrf.mxu0
        %v671 = vadd.f32 0.0, %v670
        %v672 = vpop.f32.mrf.mxu0
        %673 = vdwg.mxu0
        %v674 = vadd.f32 %v539, %v636
        %v675 = vadd.f32 %v540, %v641
        %v676 = vadd.f32 %v541, %v646
        %v677 = vadd.f32 %v542, %v651
        %v678 = vadd.f32 %v543, %v656
        %v679 = vadd.f32 %v544, %v661
        %v680 = vadd.f32 %v545, %v666
        %v681 = vadd.f32 %v546, %v671
        %v698 = vrot.slane %v336, 1
        %v699 = vrot.slane %v337, 1
        %v700 = vsel %vm391, %v698, %v699
        %v701 = vrot.slane %v340, 1
        %v702 = vrot.slane %v341, 1
        %v703 = vsel %vm391, %v701, %v702
        %v704 = vrot.slane %v344, 1
        %v705 = vrot.slane %v345, 1
        %v706 = vsel %vm391, %v704, %v705
        %v707 = vrot.slane %v348, 1
        %v708 = vrot.slane %v349, 1
        %v709 = vsel %vm391, %v707, %v708
        %v710 = vrot.slane %v352, 1
        %v711 = vrot.slane %v353, 1
        %v712 = vsel %vm391, %v710, %v711
        %v713 = vrot.slane %v356, 1
        %v714 = vrot.slane %v357, 1
        %v715 = vsel %vm391, %v713, %v714
        %v716 = vrot.slane %v360, 1
        %v717 = vrot.slane %v361, 1
        %v718 = vsel %vm391, %v716, %v717
        %v719 = vrot.slane %v364, 1
        %v720 = vrot.slane %v365, 1
        %v721 = vsel %vm391, %v719, %v720
        %s722 = scalar_lea.vmem %s2, 8
        %v723 = vld [vmem:[%s722] sm:$0xff]
        %v724 = vsel %vm417, %v336, 0
        %v726 = vsel %vm417, %v340, 0
        %v728 = vsel %vm417, %v344, 0
        %v730 = vsel %vm417, %v348, 0
        %v732 = vsel %vm417, %v352, 0
        %v734 = vsel %vm417, %v356, 0
        %v736 = vsel %vm417, %v360, 0
        %v738 = vsel %vm417, %v364, 0
        %740 = vmatprep.subr.mxu0 0.0
        %741 = vmatpush1.msra.mxu0 0.0
        %742 = vmatprep.subr.mxu0 0.0
        %743 = vmatpush1.msra.mxu0 0.0
        %744 = vmatprep.subr.mxu0 0.0
        %745 = vmatpush1.msra.mxu0 0.0
        %746 = vmatprep.subr.mxu0 0.0
        %747 = vmatpush1.msra.mxu0 0.0
        %748 = vmatprep.subr.mxu0 0.0
        %749 = vmatpush1.msra.mxu0 0.0
        %750 = vmatprep.subr.mxu0 0.0
        %751 = vmatpush1.msra.mxu0 0.0
        %752 = vmatprep.subr.mxu0 0.0
        %753 = vmatpush1.msra.mxu0 0.0
        %754 = vmatprep.subr.mxu0 0.0
        %755 = vmatpush1.msra.mxu0 0.0
        %756 = vmatprep.subr.mxu0 0.0
        %757 = vmatpush1.msra.mxu0 0.0
        %758 = vmatprep.subr.mxu0 0.0
        %759 = vmatpush1.msra.mxu0 0.0
        %760 = vmatprep.subr.mxu0 0.0
        %761 = vmatpush1.msra.mxu0 0.0
        %762 = vmatprep.subr.mxu0 0.0
        %763 = vmatpush1.msra.mxu0 0.0
        %764 = vmatprep.subr.mxu0 0.0
        %765 = vmatpush1.msra.mxu0 0.0
        %766 = vmatprep.subr.mxu0 0.0
        %767 = vmatpush1.msra.mxu0 0.0
        %768 = vmatprep.subr.mxu0 0.0
        %769 = vmatpush1.msra.mxu0 0.0
        %770 = vmatprep.subr.mxu0 0.0
        %771 = vmatpush1.msra.mxu0 %v723
        %772 = vmatprep.subr.mxu0 0.0
        %773 = vmatpush2.msra.mxu0 0.0
        %774 = vmatprep.subr.mxu0 0.0
        %775 = vmatpush2.msra.mxu0 0.0
        %776 = vmatprep.subr.mxu0 0.0
        %777 = vmatpush2.msra.mxu0 0.0
        %778 = vmatprep.subr.mxu0 0.0
        %779 = vmatpush2.msra.mxu0 0.0
        %780 = vmatprep.subr.mxu0 0.0
        %781 = vmatpush2.msra.mxu0 0.0
        %782 = vmatprep.subr.mxu0 0.0
        %783 = vmatpush2.msra.mxu0 0.0
        %784 = vmatprep.subr.mxu0 0.0
        %785 = vmatpush2.msra.mxu0 0.0
        %786 = vmatprep.subr.mxu0 0.0
        %787 = vmatpush2.msra.mxu0 0.0
        %788 = vmatprep.subr.mxu0 0.0
        %789 = vmatpush2.msra.mxu0 0.0
        %790 = vmatprep.subr.mxu0 0.0
        %791 = vmatpush2.msra.mxu0 0.0
        %792 = vmatprep.subr.mxu0 0.0
        %793 = vmatpush2.msra.mxu0 0.0
        %794 = vmatprep.subr.mxu0 0.0
        %795 = vmatpush2.msra.mxu0 0.0
        %796 = vmatprep.subr.mxu0 0.0
        %797 = vmatpush2.msra.mxu0 0.0
        %798 = vmatprep.subr.mxu0 0.0
        %799 = vmatpush2.msra.mxu0 0.0
        %800 = vmatprep.subr.mxu0 0.0
        %801 = vmatpush2.msra.mxu0 0.0
        %802 = vmatprep.subr.mxu0 0.0
        %803 = vmatpush2.msra.mxu0 0.0
        %804 = vmatprep.mubr.f32.mxu0 0.0
        %805 = vmatmul.mubr.f32.gmra.mxu0 %v724
        %v806 = vpop.f32.mrf.mxu0
        %v807 = vadd.f32 0.0, %v806
        %v808 = vpop.f32.mrf.mxu0
        %809 = vmatprep.mubr.f32.mxu0 0.0
        %810 = vmatmul.mubr.f32.gmra.mxu0 %v726
        %v811 = vpop.f32.mrf.mxu0
        %v812 = vadd.f32 0.0, %v811
        %v813 = vpop.f32.mrf.mxu0
        %814 = vmatprep.mubr.f32.mxu0 0.0
        %815 = vmatmul.mubr.f32.gmra.mxu0 %v728
        %v816 = vpop.f32.mrf.mxu0
        %v817 = vadd.f32 0.0, %v816
        %v818 = vpop.f32.mrf.mxu0
        %819 = vmatprep.mubr.f32.mxu0 0.0
        %820 = vmatmul.mubr.f32.gmra.mxu0 %v730
        %v821 = vpop.f32.mrf.mxu0
        %v822 = vadd.f32 0.0, %v821
        %v823 = vpop.f32.mrf.mxu0
        %824 = vmatprep.mubr.f32.mxu0 0.0
        %825 = vmatmul.mubr.f32.gmra.mxu0 %v732
        %v826 = vpop.f32.mrf.mxu0
        %v827 = vadd.f32 0.0, %v826
        %v828 = vpop.f32.mrf.mxu0
        %829 = vmatprep.mubr.f32.mxu0 0.0
        %830 = vmatmul.mubr.f32.gmra.mxu0 %v734
        %v831 = vpop.f32.mrf.mxu0
        %v832 = vadd.f32 0.0, %v831
        %v833 = vpop.f32.mrf.mxu0
        %834 = vmatprep.mubr.f32.mxu0 0.0
        %835 = vmatmul.mubr.f32.gmra.mxu0 %v736
        %v836 = vpop.f32.mrf.mxu0
        %v837 = vadd.f32 0.0, %v836
        %v838 = vpop.f32.mrf.mxu0
        %839 = vmatprep.mubr.f32.mxu0 0.0
        %840 = vmatmul.mubr.f32.gmra.mxu0 %v738
        %v841 = vpop.f32.mrf.mxu0
        %v842 = vadd.f32 0.0, %v841
        %v843 = vpop.f32.mrf.mxu0
        %844 = vdwg.mxu0
        %v845 = vadd.f32 %v674, %v807
        %v846 = vadd.f32 %v675, %v812
        %v847 = vadd.f32 %v676, %v817
        %v848 = vadd.f32 %v677, %v822
        %v849 = vadd.f32 %v678, %v827
        %v850 = vadd.f32 %v679, %v832
        %v851 = vadd.f32 %v680, %v837
        %v852 = vadd.f32 %v681, %v842
        %s853 = scalar_lea.vmem %s3, 4
        %v854 = vld [vmem:[%s853] sm:$0xf]
        %v855 = vsel %vm548, %v700, 0
        %v857 = vsel %vm548, %v703, 0
        %v859 = vsel %vm548, %v706, 0
        %v861 = vsel %vm548, %v709, 0
        %v863 = vsel %vm548, %v712, 0
        %v865 = vsel %vm548, %v715, 0
        %v867 = vsel %vm548, %v718, 0
        %v869 = vsel %vm548, %v721, 0
        %v872 = vsel %vm565, %v854, 0
        %874 = vmatprep.subr.mxu0 0.0
        %875 = vmatpush1.msra.mxu0 0.0
        %876 = vmatprep.subr.mxu0 0.0
        %877 = vmatpush1.msra.mxu0 0.0
        %878 = vmatprep.subr.mxu0 0.0
        %879 = vmatpush1.msra.mxu0 0.0
        %880 = vmatprep.subr.mxu0 0.0
        %881 = vmatpush1.msra.mxu0 0.0
        %882 = vmatprep.subr.mxu0 0.0
        %883 = vmatpush1.msra.mxu0 0.0
        %884 = vmatprep.subr.mxu0 0.0
        %885 = vmatpush1.msra.mxu0 0.0
        %886 = vmatprep.subr.mxu0 0.0
        %887 = vmatpush1.msra.mxu0 0.0
        %888 = vmatprep.subr.mxu0 0.0
        %889 = vmatpush1.msra.mxu0 0.0
        %890 = vmatprep.subr.mxu0 0.0
        %891 = vmatpush1.msra.mxu0 0.0
        %892 = vmatprep.subr.mxu0 0.0
        %893 = vmatpush1.msra.mxu0 0.0
        %894 = vmatprep.subr.mxu0 0.0
        %895 = vmatpush1.msra.mxu0 0.0
        %896 = vmatprep.subr.mxu0 0.0
        %897 = vmatpush1.msra.mxu0 0.0
        %898 = vmatprep.subr.mxu0 0.0
        %899 = vmatpush1.msra.mxu0 0.0
        %900 = vmatprep.subr.mxu0 0.0
        %901 = vmatpush1.msra.mxu0 0.0
        %902 = vmatprep.subr.mxu0 0.0
        %903 = vmatpush1.msra.mxu0 0.0
        %904 = vmatprep.subr.mxu0 0.0
        %905 = vmatpush1.msra.mxu0 %v872
        %906 = vmatprep.subr.mxu0 0.0
        %907 = vmatpush2.msra.mxu0 0.0
        %908 = vmatprep.subr.mxu0 0.0
        %909 = vmatpush2.msra.mxu0 0.0
        %910 = vmatprep.subr.mxu0 0.0
        %911 = vmatpush2.msra.mxu0 0.0
        %912 = vmatprep.subr.mxu0 0.0
        %913 = vmatpush2.msra.mxu0 0.0
        %914 = vmatprep.subr.mxu0 0.0
        %915 = vmatpush2.msra.mxu0 0.0
        %916 = vmatprep.subr.mxu0 0.0
        %917 = vmatpush2.msra.mxu0 0.0
        %918 = vmatprep.subr.mxu0 0.0
        %919 = vmatpush2.msra.mxu0 0.0
        %920 = vmatprep.subr.mxu0 0.0
        %921 = vmatpush2.msra.mxu0 0.0
        %922 = vmatprep.subr.mxu0 0.0
        %923 = vmatpush2.msra.mxu0 0.0
        %924 = vmatprep.subr.mxu0 0.0
        %925 = vmatpush2.msra.mxu0 0.0
        %926 = vmatprep.subr.mxu0 0.0
        %927 = vmatpush2.msra.mxu0 0.0
        %928 = vmatprep.subr.mxu0 0.0
        %929 = vmatpush2.msra.mxu0 0.0
        %930 = vmatprep.subr.mxu0 0.0
        %931 = vmatpush2.msra.mxu0 0.0
        %932 = vmatprep.subr.mxu0 0.0
        %933 = vmatpush2.msra.mxu0 0.0
        %934 = vmatprep.subr.mxu0 0.0
        %935 = vmatpush2.msra.mxu0 0.0
        %936 = vmatprep.subr.mxu0 0.0
        %937 = vmatpush2.msra.mxu0 0.0
        %938 = vmatprep.mubr.f32.mxu0 0.0
        %939 = vmatmul.mubr.f32.gmra.mxu0 %v855
        %v940 = vpop.f32.mrf.mxu0
        %v941 = vadd.f32 0.0, %v940
        %v942 = vpop.f32.mrf.mxu0
        %943 = vmatprep.mubr.f32.mxu0 0.0
        %944 = vmatmul.mubr.f32.gmra.mxu0 %v857
        %v945 = vpop.f32.mrf.mxu0
        %v946 = vadd.f32 0.0, %v945
        %v947 = vpop.f32.mrf.mxu0
        %948 = vmatprep.mubr.f32.mxu0 0.0
        %949 = vmatmul.mubr.f32.gmra.mxu0 %v859
        %v950 = vpop.f32.mrf.mxu0
        %v951 = vadd.f32 0.0, %v950
        %v952 = vpop.f32.mrf.mxu0
        %953 = vmatprep.mubr.f32.mxu0 0.0
        %954 = vmatmul.mubr.f32.gmra.mxu0 %v861
        %v955 = vpop.f32.mrf.mxu0
        %v956 = vadd.f32 0.0, %v955
        %v957 = vpop.f32.mrf.mxu0
        %958 = vmatprep.mubr.f32.mxu0 0.0
        %959 = vmatmul.mubr.f32.gmra.mxu0 %v863
        %v960 = vpop.f32.mrf.mxu0
        %v961 = vadd.f32 0.0, %v960
        %v962 = vpop.f32.mrf.mxu0
        %963 = vmatprep.mubr.f32.mxu0 0.0
        %964 = vmatmul.mubr.f32.gmra.mxu0 %v865
        %v965 = vpop.f32.mrf.mxu0
        %v966 = vadd.f32 0.0, %v965
        %v967 = vpop.f32.mrf.mxu0
        %968 = vmatprep.mubr.f32.mxu0 0.0
        %969 = vmatmul.mubr.f32.gmra.mxu0 %v867
        %v970 = vpop.f32.mrf.mxu0
        %v971 = vadd.f32 0.0, %v970
        %v972 = vpop.f32.mrf.mxu0
        %973 = vmatprep.mubr.f32.mxu0 0.0
        %974 = vmatmul.mubr.f32.gmra.mxu0 %v869
        %v975 = vpop.f32.mrf.mxu0
        %v976 = vadd.f32 0.0, %v975
        %v977 = vpop.f32.mrf.mxu0
        %978 = vdwg.mxu0
        %v979 = vadd.f32 %v845, %v941
        %v980 = vadd.f32 %v846, %v946
        %v981 = vadd.f32 %v847, %v951
        %v982 = vadd.f32 %v848, %v956
        %v983 = vadd.f32 %v849, %v961
        %v984 = vadd.f32 %v850, %v966
        %v985 = vadd.f32 %v851, %v971
        %v986 = vadd.f32 %v852, %v976
        %v989 = vrot.slane %v366, 1
        %v990 = vrot.slane %v367, 1
        %v991 = vsel %vm391, %v989, %v990
        %s992 = scalar_lea.vmem %s2, 16
        %v993 = vld [vmem:[%s992] sm:$0xff]
        %v994 = vsel %vm417, %v366, 0
        %996 = vmatprep.subr.mxu0 0.0
        %997 = vmatpush1.msra.mxu0 0.0
        %998 = vmatprep.subr.mxu0 0.0
        %999 = vmatpush1.msra.mxu0 0.0
        %1000 = vmatprep.subr.mxu0 0.0
        %1001 = vmatpush1.msra.mxu0 0.0
        %1002 = vmatprep.subr.mxu0 0.0
        %1003 = vmatpush1.msra.mxu0 0.0
        %1004 = vmatprep.subr.mxu0 0.0
        %1005 = vmatpush1.msra.mxu0 0.0
        %1006 = vmatprep.subr.mxu0 0.0
        %1007 = vmatpush1.msra.mxu0 0.0
        %1008 = vmatprep.subr.mxu0 0.0
        %1009 = vmatpush1.msra.mxu0 0.0
        %1010 = vmatprep.subr.mxu0 0.0
        %1011 = vmatpush1.msra.mxu0 0.0
        %1012 = vmatprep.subr.mxu0 0.0
        %1013 = vmatpush1.msra.mxu0 0.0
        %1014 = vmatprep.subr.mxu0 0.0
        %1015 = vmatpush1.msra.mxu0 0.0
        %1016 = vmatprep.subr.mxu0 0.0
        %1017 = vmatpush1.msra.mxu0 0.0
        %1018 = vmatprep.subr.mxu0 0.0
        %1019 = vmatpush1.msra.mxu0 0.0
        %1020 = vmatprep.subr.mxu0 0.0
        %1021 = vmatpush1.msra.mxu0 0.0
        %1022 = vmatprep.subr.mxu0 0.0
        %1023 = vmatpush1.msra.mxu0 0.0
        %1024 = vmatprep.subr.mxu0 0.0
        %1025 = vmatpush1.msra.mxu0 0.0
        %1026 = vmatprep.subr.mxu0 0.0
        %1027 = vmatpush1.msra.mxu0 %v993
        %1028 = vmatprep.subr.mxu0 0.0
        %1029 = vmatpush2.msra.mxu0 0.0
        %1030 = vmatprep.subr.mxu0 0.0
        %1031 = vmatpush2.msra.mxu0 0.0
        %1032 = vmatprep.subr.mxu0 0.0
        %1033 = vmatpush2.msra.mxu0 0.0
        %1034 = vmatprep.subr.mxu0 0.0
        %1035 = vmatpush2.msra.mxu0 0.0
        %1036 = vmatprep.subr.mxu0 0.0
        %1037 = vmatpush2.msra.mxu0 0.0
        %1038 = vmatprep.subr.mxu0 0.0
        %1039 = vmatpush2.msra.mxu0 0.0
        %1040 = vmatprep.subr.mxu0 0.0
        %1041 = vmatpush2.msra.mxu0 0.0
        %1042 = vmatprep.subr.mxu0 0.0
        %1043 = vmatpush2.msra.mxu0 0.0
        %1044 = vmatprep.subr.mxu0 0.0
        %1045 = vmatpush2.msra.mxu0 0.0
        %1046 = vmatprep.subr.mxu0 0.0
        %1047 = vmatpush2.msra.mxu0 0.0
        %1048 = vmatprep.subr.mxu0 0.0
        %1049 = vmatpush2.msra.mxu0 0.0
        %1050 = vmatprep.subr.mxu0 0.0
        %1051 = vmatpush2.msra.mxu0 0.0
        %1052 = vmatprep.subr.mxu0 0.0
        %1053 = vmatpush2.msra.mxu0 0.0
        %1054 = vmatprep.subr.mxu0 0.0
        %1055 = vmatpush2.msra.mxu0 0.0
        %1056 = vmatprep.subr.mxu0 0.0
        %1057 = vmatpush2.msra.mxu0 0.0
        %1058 = vmatprep.subr.mxu0 0.0
        %1059 = vmatpush2.msra.mxu0 0.0
        %1060 = vmatprep.mubr.f32.mxu0 0.0
        %1061 = vmatmul.mubr.f32.gmra.mxu0 %v420
        %v1062 = vpop.f32.mrf.mxu0
        %v1063 = vadd.f32 0.0, %v1062
        %v1064 = vpop.f32.mrf.mxu0
        %1065 = vmatprep.mubr.f32.mxu0 0.0
        %1066 = vmatmul.mubr.f32.gmra.mxu0 %v422
        %v1067 = vpop.f32.mrf.mxu0
        %v1068 = vadd.f32 0.0, %v1067
        %v1069 = vpop.f32.mrf.mxu0
        %1070 = vmatprep.mubr.f32.mxu0 0.0
        %1071 = vmatmul.mubr.f32.gmra.mxu0 %v424
        %v1072 = vpop.f32.mrf.mxu0
        %v1073 = vadd.f32 0.0, %v1072
        %v1074 = vpop.f32.mrf.mxu0
        %1075 = vmatprep.mubr.f32.mxu0 0.0
        %1076 = vmatmul.mubr.f32.gmra.mxu0 %v426
        %v1077 = vpop.f32.mrf.mxu0
        %v1078 = vadd.f32 0.0, %v1077
        %v1079 = vpop.f32.mrf.mxu0
        %1080 = vmatprep.mubr.f32.mxu0 0.0
        %1081 = vmatmul.mubr.f32.gmra.mxu0 %v428
        %v1082 = vpop.f32.mrf.mxu0
        %v1083 = vadd.f32 0.0, %v1082
        %v1084 = vpop.f32.mrf.mxu0
        %1085 = vmatprep.mubr.f32.mxu0 0.0
        %1086 = vmatmul.mubr.f32.gmra.mxu0 %v430
        %v1087 = vpop.f32.mrf.mxu0
        %v1088 = vadd.f32 0.0, %v1087
        %v1089 = vpop.f32.mrf.mxu0
        %1090 = vmatprep.mubr.f32.mxu0 0.0
        %1091 = vmatmul.mubr.f32.gmra.mxu0 %v432
        %v1092 = vpop.f32.mrf.mxu0
        %v1093 = vadd.f32 0.0, %v1092
        %v1094 = vpop.f32.mrf.mxu0
        %1095 = vmatprep.mubr.f32.mxu0 0.0
        %1096 = vmatmul.mubr.f32.gmra.mxu0 %v994
        %v1097 = vpop.f32.mrf.mxu0
        %v1098 = vadd.f32 0.0, %v1097
        %v1099 = vpop.f32.mrf.mxu0
        %1100 = vdwg.mxu0
        %v1101 = vadd.f32 %v979, %v1063
        %v1102 = vadd.f32 %v980, %v1068
        %v1103 = vadd.f32 %v981, %v1073
        %v1104 = vadd.f32 %v982, %v1078
        %v1105 = vadd.f32 %v983, %v1083
        %v1106 = vadd.f32 %v984, %v1088
        %v1107 = vadd.f32 %v985, %v1093
        %v1108 = vadd.f32 %v986, %v1098
        %s1109 = scalar_lea.vmem %s3, 8
        %v1110 = vld [vmem:[%s1109] sm:$0xf]
        %v1111 = vsel %vm548, %v991, 0
        %v1114 = vsel %vm565, %v1110, 0
        %1116 = vmatprep.subr.mxu0 0.0
        %1117 = vmatpush1.msra.mxu0 0.0
        %1118 = vmatprep.subr.mxu0 0.0
        %1119 = vmatpush1.msra.mxu0 0.0
        %1120 = vmatprep.subr.mxu0 0.0
        %1121 = vmatpush1.msra.mxu0 0.0
        %1122 = vmatprep.subr.mxu0 0.0
        %1123 = vmatpush1.msra.mxu0 0.0
        %1124 = vmatprep.subr.mxu0 0.0
        %1125 = vmatpush1.msra.mxu0 0.0
        %1126 = vmatprep.subr.mxu0 0.0
        %1127 = vmatpush1.msra.mxu0 0.0
        %1128 = vmatprep.subr.mxu0 0.0
        %1129 = vmatpush1.msra.mxu0 0.0
        %1130 = vmatprep.subr.mxu0 0.0
        %1131 = vmatpush1.msra.mxu0 0.0
        %1132 = vmatprep.subr.mxu0 0.0
        %1133 = vmatpush1.msra.mxu0 0.0
        %1134 = vmatprep.subr.mxu0 0.0
        %1135 = vmatpush1.msra.mxu0 0.0
        %1136 = vmatprep.subr.mxu0 0.0
        %1137 = vmatpush1.msra.mxu0 0.0
        %1138 = vmatprep.subr.mxu0 0.0
        %1139 = vmatpush1.msra.mxu0 0.0
        %1140 = vmatprep.subr.mxu0 0.0
        %1141 = vmatpush1.msra.mxu0 0.0
        %1142 = vmatprep.subr.mxu0 0.0
        %1143 = vmatpush1.msra.mxu0 0.0
        %1144 = vmatprep.subr.mxu0 0.0
        %1145 = vmatpush1.msra.mxu0 0.0
        %1146 = vmatprep.subr.mxu0 0.0
        %1147 = vmatpush1.msra.mxu0 %v1114
        %1148 = vmatprep.subr.mxu0 0.0
        %1149 = vmatpush2.msra.mxu0 0.0
        %1150 = vmatprep.subr.mxu0 0.0
        %1151 = vmatpush2.msra.mxu0 0.0
        %1152 = vmatprep.subr.mxu0 0.0
        %1153 = vmatpush2.msra.mxu0 0.0
        %1154 = vmatprep.subr.mxu0 0.0
        %1155 = vmatpush2.msra.mxu0 0.0
        %1156 = vmatprep.subr.mxu0 0.0
        %1157 = vmatpush2.msra.mxu0 0.0
        %1158 = vmatprep.subr.mxu0 0.0
        %1159 = vmatpush2.msra.mxu0 0.0
        %1160 = vmatprep.subr.mxu0 0.0
        %1161 = vmatpush2.msra.mxu0 0.0
        %1162 = vmatprep.subr.mxu0 0.0
        %1163 = vmatpush2.msra.mxu0 0.0
        %1164 = vmatprep.subr.mxu0 0.0
        %1165 = vmatpush2.msra.mxu0 0.0
        %1166 = vmatprep.subr.mxu0 0.0
        %1167 = vmatpush2.msra.mxu0 0.0
        %1168 = vmatprep.subr.mxu0 0.0
        %1169 = vmatpush2.msra.mxu0 0.0
        %1170 = vmatprep.subr.mxu0 0.0
        %1171 = vmatpush2.msra.mxu0 0.0
        %1172 = vmatprep.subr.mxu0 0.0
        %1173 = vmatpush2.msra.mxu0 0.0
        %1174 = vmatprep.subr.mxu0 0.0
        %1175 = vmatpush2.msra.mxu0 0.0
        %1176 = vmatprep.subr.mxu0 0.0
        %1177 = vmatpush2.msra.mxu0 0.0
        %1178 = vmatprep.subr.mxu0 0.0
        %1179 = vmatpush2.msra.mxu0 0.0
        %1180 = vmatprep.mubr.f32.mxu0 0.0
        %1181 = vmatmul.mubr.f32.gmra.mxu0 %v551
        %v1182 = vpop.f32.mrf.mxu0
        %v1183 = vadd.f32 0.0, %v1182
        %v1184 = vpop.f32.mrf.mxu0
        %1185 = vmatprep.mubr.f32.mxu0 0.0
        %1186 = vmatmul.mubr.f32.gmra.mxu0 %v553
        %v1187 = vpop.f32.mrf.mxu0
        %v1188 = vadd.f32 0.0, %v1187
        %v1189 = vpop.f32.mrf.mxu0
        %1190 = vmatprep.mubr.f32.mxu0 0.0
        %1191 = vmatmul.mubr.f32.gmra.mxu0 %v555
        %v1192 = vpop.f32.mrf.mxu0
        %v1193 = vadd.f32 0.0, %v1192
        %v1194 = vpop.f32.mrf.mxu0
        %1195 = vmatprep.mubr.f32.mxu0 0.0
        %1196 = vmatmul.mubr.f32.gmra.mxu0 %v557
        %v1197 = vpop.f32.mrf.mxu0
        %v1198 = vadd.f32 0.0, %v1197
        %v1199 = vpop.f32.mrf.mxu0
        %1200 = vmatprep.mubr.f32.mxu0 0.0
        %1201 = vmatmul.mubr.f32.gmra.mxu0 %v559
        %v1202 = vpop.f32.mrf.mxu0
        %v1203 = vadd.f32 0.0, %v1202
        %v1204 = vpop.f32.mrf.mxu0
        %1205 = vmatprep.mubr.f32.mxu0 0.0
        %1206 = vmatmul.mubr.f32.gmra.mxu0 %v561
        %v1207 = vpop.f32.mrf.mxu0
        %v1208 = vadd.f32 0.0, %v1207
        %v1209 = vpop.f32.mrf.mxu0
        %1210 = vmatprep.mubr.f32.mxu0 0.0
        %1211 = vmatmul.mubr.f32.gmra.mxu0 %v563
        %v1212 = vpop.f32.mrf.mxu0
        %v1213 = vadd.f32 0.0, %v1212
        %v1214 = vpop.f32.mrf.mxu0
        %1215 = vmatprep.mubr.f32.mxu0 0.0
        %1216 = vmatmul.mubr.f32.gmra.mxu0 %v1111
        %v1217 = vpop.f32.mrf.mxu0
        %v1218 = vadd.f32 0.0, %v1217
        %v1219 = vpop.f32.mrf.mxu0
        %1220 = vdwg.mxu0
        %v1221 = vadd.f32 %v1101, %v1183
        %v1222 = vadd.f32 %v1102, %v1188
        %v1223 = vadd.f32 %v1103, %v1193
        %v1224 = vadd.f32 %v1104, %v1198
        %v1225 = vadd.f32 %v1105, %v1203
        %v1226 = vadd.f32 %v1106, %v1208
        %v1227 = vadd.f32 %v1107, %v1213
        %v1228 = vadd.f32 %v1108, %v1218
        %1229 = vxpose.xlu0.b32.start [1/16] %v1221, 128
        %1230 = vxpose.xlu0.b32.cont [2/16] %v1222, 128
        %1231 = vxpose.xlu0.b32.cont [3/16] %v1223, 128
        %1232 = vxpose.xlu0.b32.cont [4/16] %v1224, 128
        %1233 = vxpose.xlu0.b32.cont [5/16] %v1225, 128
        %1234 = vxpose.xlu0.b32.cont [6/16] %v1226, 128
        %1235 = vxpose.xlu0.b32.cont [7/16] %v1227, 128
        %1236 = vxpose.xlu0.b32.cont [8/16] %v1228, 128
        %1237 = vxpose.xlu0.b32.cont [9/16] 0.0, 128
        %1238 = vxpose.xlu0.b32.cont [10/16] 0.0, 128
        %1239 = vxpose.xlu0.b32.cont [11/16] 0.0, 128
        %1240 = vxpose.xlu0.b32.cont [12/16] 0.0, 128
        %1241 = vxpose.xlu0.b32.cont [13/16] 0.0, 128
        %1242 = vxpose.xlu0.b32.cont [14/16] 0.0, 128
        %1243 = vxpose.xlu0.b32.cont [15/16] 0.0, 128
        %1244 = vxpose.xlu0.b32.end [16/16] 0.0, 128
        %v1245 = vpop.trf.xlu0
        %v1246 = vpop.trf.xlu0
        %v1247 = vpop.trf.xlu0
        %v1248 = vpop.trf.xlu0
        %v1249 = vpop.trf.xlu0
        %v1250 = vpop.trf.xlu0
        %v1251 = vpop.trf.xlu0
        %v1252 = vpop.trf.xlu0
        %v1253 = vpop.trf.xlu0
        %v1254 = vpop.trf.xlu0
        %v1255 = vpop.trf.xlu0
        %v1256 = vpop.trf.xlu0
        %v1257 = vpop.trf.xlu0
        %v1258 = vpop.trf.xlu0
        %v1259 = vpop.trf.xlu0
        %v1260 = vpop.trf.xlu0
        %vm1261 = vcmask 519168
        %1262 = vst.msk [vmem:[%s297] sm:$0xf] %vm1261, %v1245
        %s1263 = sand.u32 %s164, 1
        %s1264 = scalar_lea.sflag [#allocation3], %s1263
        %s1265 = sand.u32 %s164, 1
        %s1266 = smul.addr %s1265, 4
        %s1267 = scalar_lea.vmem [#allocation2], %s1266
        // Predicated region
        $region41: #{tpu_custom_call.1} parent=39 // pred_check
          %p1268 = pneg %p174
        $region42: #{tpu_custom_call.1} parent=39 // pred_check_branch
          %1270 = sbr.rel (%p1268) target = $region44
        $region43: #{tpu_custom_call.1} parent=39 // pred_region
          %s1272 = ssub.s32 64, 64
          %1273 = vsyncadd %s1264, %s1272
          %s1274 = sadd.s32 %s24, %s23
          %s1275 = smul.addr %s1274, 64
          %s1276 = scalar_lea.hbm %s5, %s1275
          %s1278 = sshll.u32 %s1267, 4
          %s1279 = int_to_ptr.vmem [resolvable:$true] %s1278
          %1281 = dma.vmem_to_hbm [thread:$0]  %s1279, 64, %s1276, %s1264
        $region44: #{tpu_custom_call.1} parent=39 // pred_fallthru
          _
      $region40: #{tpu_custom_call.1} parent=5 // pred_fallthru
        _
      %p1282 = scmp.le.s32.totalorder 2, %s14
      // Predicated region
      $region45: #{tpu_custom_call.1} parent=5 // pred_check
        %p1283 = pneg %p1282
      $region46: #{tpu_custom_call.1} parent=5 // pred_check_branch
        %1285 = sbr.rel (%p1283) target = $region48
      $region47: #{tpu_custom_call.1} parent=5 // pred_region
        %s1286 = ssub.s32 %s14, 2
        // Predicated region
        $region49: #{tpu_custom_call.1} parent=47 // pred_check
          %p1287 = pneg %p180
        $region50: #{tpu_custom_call.1} parent=47 // pred_check_branch
          %1289 = sbr.rel (%p1287) target = $region52
        $region51: #{tpu_custom_call.1} parent=47 // pred_region
          %s1290 = sand.u32 %s165, 1
          %s1291 = scalar_lea.sflag [#allocation3], %s1290
          %s1292 = sand.u32 %s165, 1
          %s1293 = smul.addr %s1292, 4
          %s1294 = scalar_lea.vmem [#allocation2], %s1293
          %1295 = dma.done %s1291, 64
        $region52: #{tpu_custom_call.1} parent=47 // pred_fallthru
          _
      $region48: #{tpu_custom_call.1} parent=5 // pred_fallthru
        _
    $region6: #{tpu_custom_call.1} parent=1 // loop_footer
      %s18 = sadd.s32 1, %s14
    $region7: #{tpu_custom_call.1} parent=1 // loop_footer_branch
      %13 = sbr.rel target = $region3
    $region8: #{tpu_custom_call.1} parent=1 // loop_exit
      _
    %1296 = vsyncpa [#allocation3], 1
    %s1297 = scalar_lea.sflag [#allocation3], 1
    %1298 = vsyncpa %s1297, 1

</llo_original>
